<compile_context>
chip_gen: v6e
topology: v6e:2x2x1
jax: 0.10.0
libtpu: 0.0.40
codegen_flags: <defaults>
</compile_context>

<pallas_src>
import jax
import jax.numpy as jnp
from jax.experimental import pallas as pl
from jax.experimental.pallas import tpu as pltpu

_LANE = 128
_TILE_BYTES = 2 * 1024 * 1024  # ~2 MiB per input tile


def _drop_path_kernel(x_ref, scale_ref, o_ref):
    # Pure streaming broadcast-multiply: (TILE_R, L) * (TILE_R, 1) -> (TILE_R, L).
    o_ref[...] = x_ref[...] * scale_ref[...]


def _choose_row_width(n_pad: int, batch: int) -> int:
    """Pick a lane-dense row width L (multiple of 128) that divides n_pad."""
    candidates = [2048, 1024, 512, 256, 128]
    divisors = [c for c in candidates if n_pad % c == 0]
    # Prefer the widest L that still leaves >= 8 total rows (sublane density).
    for c in divisors:
        if batch * (n_pad // c) >= 8:
            return c
    return divisors[-1]  # n_pad is always a multiple of 128


def drop_path(x, drop_prob: float = 0.0, training: bool = False,
              scale_by_keep: bool = True, *, key=None, seed: int = 0):
    """Pallas implementation of photoholmes' drop_path.

    Pass a fresh `key` per call/layer/step to avoid correlated masks.
    """
    if drop_prob == 0.0 or not training:
        return x
    keep_prob = 1.0 - drop_prob
    if key is None:
        key = jax.random.PRNGKey(seed)

    b = x.shape[0]
    n = 1
    for d in x.shape[1:]:
        n *= d

    # Per-sample keep mask, hoisted out of the hot loop (matches
    # x.new_empty((B,1,..,1)).bernoulli_(keep_prob) [/ keep_prob]).
    u = jax.random.uniform(key, (b,), dtype=jnp.float32)
    keep = (u < keep_prob).astype(jnp.float32)
    if scale_by_keep and keep_prob > 0.0:
        keep = keep / keep_prob

    # Flatten to a lane-dense (R, L) slab; pad N to a multiple of 128 if needed
    # so output stores are unmasked (no vst.msk partial stores).
    n_pad = ((n + _LANE - 1) // _LANE) * _LANE
    x2 = x.reshape(b, n)
    if n_pad != n:
        x2 = jnp.pad(x2, ((0, 0), (0, n_pad - n)))
    l = _choose_row_width(n_pad, b)
    rows_per_sample = n_pad // l
    r = b * rows_per_sample
    x2 = x2.reshape(r, l)
    row_scale = jnp.repeat(keep, rows_per_sample).reshape(r, 1).astype(x.dtype)

    # Row-tile sized for ~2 MiB per input tile so double-buffered in+out tiles
    # fit the scoped-VMEM default on every generation (16 MiB v5e, 32 MiB
    # v6e/v7x) with plenty of headroom under v7x's 64 MiB physical VMEM.
    bytes_per_row = l * jnp.dtype(x.dtype).itemsize
    max_tile_r = max(8, (_TILE_BYTES // bytes_per_row) // 8 * 8)
    tile_r = r if r <= max_tile_r else max_tile_r  # multiple of 8 when tiling

    out = pl.pallas_call(
        _drop_path_kernel,
        out_shape=jax.ShapeDtypeStruct((r, l), x.dtype),
        grid=(pl.cdiv(r, tile_r),),
        in_specs=[
            pl.BlockSpec((tile_r, l), lambda i: (i, 0)),   # x tile
            pl.BlockSpec((tile_r, 1), lambda i: (i, 0)),   # per-row scale
        ],
        out_specs=pl.BlockSpec((tile_r, l), lambda i: (i, 0)),
        compiler_params=pltpu.CompilerParams(
            dimension_semantics=("parallel",)),            # megacore on v7x
    )(x2, row_scale)

    out = out.reshape(b, n_pad)
    if n_pad != n:
        out = out[:, :n]
    return out.reshape(x.shape)


class DropPath:
    """Drop paths (Stochastic Depth) per sample."""

    def __init__(self, drop_prob: float = 0.0, scale_by_keep: bool = True):
        self.drop_prob = drop_prob
        self.scale_by_keep = scale_by_keep
        self.training = True  # matches nn.Module training mode for this demo

    def __call__(self, x, *, key=None, seed: int = 0):
        return drop_path(x, self.drop_prob, self.training,
                         self.scale_by_keep, key=key, seed=seed)


if __name__ == "__main__":
    root = jax.random.PRNGKey(0)
    kx, kmask = jax.random.split(root)
    x = jax.random.normal(kx, (2, 4, 16, 16), dtype=jnp.float32)

    drop_prob = 0.25
    keep_prob = 1.0 - drop_prob

    # Training path (kernel runs).
    mod = DropPath(drop_prob=drop_prob, scale_by_keep=True)
    y = jax.block_until_ready(mod(x, key=kmask))

    # Reference with the same mask derivation as the wrapper.
    u = jax.random.uniform(kmask, (x.shape[0],), dtype=jnp.float32)
    keep = (u < keep_prob).astype(jnp.float32) / keep_prob
    ref = x * keep.reshape(-1, 1, 1, 1)
    ok = bool(jnp.allclose(y, ref, atol=1e-6))

    # Sanity: each sample is either all-zero or exactly x / keep_prob.
    for i in range(x.shape[0]):
        zeroed = bool(jnp.allclose(y[i], 0.0))
        kept = bool(jnp.allclose(y[i], x[i] / keep_prob, atol=1e-5))
        ok = ok and (zeroed or kept)

    # Non-128-divisible flattened size exercises the lane-padding path.
    x_odd = jax.random.normal(kx, (3, 3, 5, 7), dtype=jnp.float32)
    y_odd = jax.block_until_ready(drop_path(x_odd, 0.5, True, True, key=kmask))
    u_odd = jax.random.uniform(kmask, (3,), dtype=jnp.float32)
    keep_odd = (u_odd < 0.5).astype(jnp.float32) / 0.5
    ok = ok and bool(jnp.allclose(y_odd, x_odd * keep_odd.reshape(-1, 1, 1, 1),
                                  atol=1e-6))

    # Eval path is identity (matches the reference early return).
    mod.training = False
    ok = ok and bool(jnp.allclose(jax.block_until_ready(mod(x)), x))

    if ok:
        print("KERNEL_OK")
    else:
        raise SystemExit("mismatch vs DropPath semantics")
</pallas_src>

<mosaic_0001>
module attributes {stable_mosaic.version = 11 : i64} {
  func.func @_drop_path_kernel(%arg0: i32, %arg1: memref<8x256xf32, #tpu.memory_space<vmem>>, %arg2: memref<8x1xf32, #tpu.memory_space<vmem>>, %arg3: memref<8x256xf32, #tpu.memory_space<vmem>>) attributes {dimension_semantics = [#tpu.dimension_semantics<parallel>], iteration_bounds = array<i64: 1>, scalar_prefetch = 0 : i64, scratch_operands = 0 : i64, tpu.core_type = #tpu.core_type<tc>, window_params = [{transform_indices = @transform_0, window_bounds = array<i64: 8, 256>}, {transform_indices = @transform_1, window_bounds = array<i64: 8, 1>}, {transform_indices = @transform_2, window_bounds = array<i64: 8, 256>}]} {
    %c0 = arith.constant 0 : index
    %c0_0 = arith.constant 0 : index
    %0 = vector.load %arg1[%c0, %c0_0] : memref<8x256xf32, #tpu.memory_space<vmem>>, vector<8x256xf32>
    %c0_1 = arith.constant 0 : index
    %c0_2 = arith.constant 0 : index
    %1 = vector.load %arg2[%c0_1, %c0_2] : memref<8x1xf32, #tpu.memory_space<vmem>>, vector<8x1xf32>
    %2 = vector.broadcast %1 : vector<8x1xf32> to vector<8x256xf32>
    %3 = arith.mulf %0, %2 : vector<8x256xf32>
    %c0_3 = arith.constant 0 : index
    %c0_4 = arith.constant 0 : index
    %4 = vector.load %arg3[%c0_3, %c0_4] : memref<8x256xf32, #tpu.memory_space<vmem>>, vector<8x256xf32>
    tpu.vector_store %arg3[%c0_3, %c0_4], %3 {strides = array<i32>} : memref<8x256xf32, #tpu.memory_space<vmem>>, vector<8x256xf32>,
    return
  }
  func.func @transform_0(%arg0: i32) -> (i32, i32) {
    %c0_i32 = arith.constant 0 : i32
    %c0_i32_0 = arith.constant 0 : i32
    return %arg0, %c0_i32 : i32, i32
  }
  func.func @transform_1(%arg0: i32) -> (i32, i32) {
    %c0_i32 = arith.constant 0 : i32
    %c0_i32_0 = arith.constant 0 : i32
    return %arg0, %c0_i32 : i32, i32
  }
  func.func @transform_2(%arg0: i32) -> (i32, i32) {
    %c0_i32 = arith.constant 0 : i32
    %c0_i32_0 = arith.constant 0 : i32
    return %arg0, %c0_i32 : i32, i32
  }
}

</mosaic_0001>

<llo_original>
// kernel: tpu_custom_call.1
$region0: #{tpu_custom_call.1}
  #allocation0 [shape = 'u32[]', space=smem, size = 0x4, offset = 0x4, fixed_abs, tag = 'smem constant byte address 0x4 - core index']
  #allocation1 [shape = 'u32[144,128]{1,0:T(1,128)}', space=vmem, size = 0x12000, scoped, tag = 'internal scratch']
  %s0 = inlined_call_operand.hbm [shape: f32[8,256], index: 0, kind: input, shape index: {}]
  %s1 = inlined_call_operand.vmem [shape: f32[8,1], index: 1, kind: input, shape index: {}]
  %s2 = inlined_call_operand.hbm [shape: f32[8,256], index: 2, kind: output, shape index: {}]
  %s3 = sld [smem:[#allocation0]]
  $region22: #{tpu_custom_call.1} parent=0
    _
  %s5 = ssub.s32 1, %s3
  %s6 = scalar_select 0, %s5, %s3
  $region1: #{tpu_custom_call.1} parent=0
    #allocation2 [shape = 'u8[8192]{0}', space=vmem, size = 0x2000, scoped, tag = 'input window, operand 0, single buffered']
    #allocation3 [shape = 's32[1]{0}', space=sflag, size = 0x4, scoped, tag = 'scoped memory for tpu_custom_call.1']
    #allocation4 [shape = 's32[1]{0}', space=sflag, size = 0x4, scoped, tag = 'scoped memory for tpu_custom_call.1']
    #allocation5 [shape = 'u8[8192]{0}', space=vmem, size = 0x2000, scoped, tag = 'output window, operand 0, single buffered']
    %7 = vsyncpa [#allocation3], 0
    %8 = vsyncpa [#allocation4], 0
    // Predicated region
    $region2: #{tpu_custom_call.1} parent=1 // pred_check
      _
    $region3: #{tpu_custom_call.1} parent=1 // pred_check_branch
      %10 = sbr.rel (0) target = $region5
    $region4: #{tpu_custom_call.1} parent=1 // pred_region
      %s12 = ssub.s32 256, 256
      %13 = vsyncadd [#allocation3], %s12
      %s15 = sshll.u32 [#allocation2], 4
      %s16 = int_to_ptr.vmem [resolvable:$true] %s15
      %18 = dma.hbm_to_vmem [thread:$0]  %s0, 256, %s16, [#allocation3]
    $region5: #{tpu_custom_call.1} parent=1 // pred_fallthru
      _
    // Predicated region
    $region6: #{tpu_custom_call.1} parent=1 // pred_check
      _
    $region7: #{tpu_custom_call.1} parent=1 // pred_check_branch
      %20 = sbr.rel (0) target = $region9
    $region8: #{tpu_custom_call.1} parent=1 // pred_region
      _
    $region9: #{tpu_custom_call.1} parent=1 // pred_fallthru
      _
    // Predicated region
    $region10: #{tpu_custom_call.1} parent=1 // pred_check
      _
    $region11: #{tpu_custom_call.1} parent=1 // pred_check_branch
      %22 = sbr.rel (0) target = $region13
    $region12: #{tpu_custom_call.1} parent=1 // pred_region
      %23 = dma.done [#allocation3], 256
    $region13: #{tpu_custom_call.1} parent=1 // pred_fallthru
      _
    %v24 = vld [vmem:[#allocation2] sm:$0xff]
    %v25 = vld [vmem:[#allocation2 + $0x8] sm:$0xff]
    %v26 = vld [vmem:[%s1] sm:$0xff]
    %28 = vset.pattern.permute.xlu0 0
    %29 = vperm.xlu0 %28, %v26
    %v30 = vpop.permute.xlu0 %29
    %v32 = vmul.f32 %v24, %v30
    %v33 = vmul.f32 %v25, %v30
    %34 = vst [vmem:[#allocation5] sm:$0xff] %v32
    %35 = vst [vmem:[#allocation5 + $0x8] sm:$0xff] %v33
    // Predicated region
    $region14: #{tpu_custom_call.1} parent=1 // pred_check
      _
    $region15: #{tpu_custom_call.1} parent=1 // pred_check_branch
      %37 = sbr.rel (0) target = $region17
    $region16: #{tpu_custom_call.1} parent=1 // pred_region
      %s39 = ssub.s32 256, 256
      %40 = vsyncadd [#allocation4], %s39
      %s42 = sshll.u32 [#allocation5], 4
      %s43 = int_to_ptr.vmem [resolvable:$true] %s42
      %45 = dma.vmem_to_hbm [thread:$0]  %s43, 256, %s2, [#allocation4]
    $region17: #{tpu_custom_call.1} parent=1 // pred_fallthru
      _
    // Predicated region
    $region18: #{tpu_custom_call.1} parent=1 // pred_check
      _
    $region19: #{tpu_custom_call.1} parent=1 // pred_check_branch
      %47 = sbr.rel (0) target = $region21
    $region20: #{tpu_custom_call.1} parent=1 // pred_region
      %48 = dma.done [#allocation4], 256
    $region21: #{tpu_custom_call.1} parent=1 // pred_fallthru
      _
    %49 = vsyncpa [#allocation3], 1
    %50 = vsyncpa [#allocation4], 1

</llo_original>
